<compile_context>
chip_gen: v7x
topology: tpu7x:2x2x1
jax: 0.10.0
libtpu: 0.0.40
codegen_flags: <defaults>
</compile_context>

<pallas_src>
import math

import jax
import jax.numpy as jnp
from jax import lax
from jax.experimental import pallas as pl
from jax.experimental.pallas import tpu as pltpu

EPS_RMS = 1e-5
EPS_LN = 1e-5


def _rotate_half(x):
    d = x.shape[-1]
    return jnp.concatenate([-x[..., d // 2:], x[..., : d // 2]], axis=-1)


# ----------------------------------------------------------------------------
# One-time probe: pin pltpu.roll's shift convention (jnp.roll-compatible?)
# ----------------------------------------------------------------------------
_ROLL_IS_JNP = None


def _roll_matches_jnp():
    global _ROLL_IS_JNP
    if _ROLL_IS_JNP is None:
        x = jnp.arange(8 * 128, dtype=jnp.float32).reshape(8, 128)

        def k(x_ref, o_ref):
            o_ref[...] = pltpu.roll(x_ref[...], 1, 1)

        y = pl.pallas_call(
            k, out_shape=jax.ShapeDtypeStruct((8, 128), jnp.float32))(x)
        _ROLL_IS_JNP = bool(jnp.array_equal(y, jnp.roll(x, 1, axis=1)))
    return _ROLL_IS_JNP


# ----------------------------------------------------------------------------
# Fused Pallas kernel: grid = (batch, layer)
# ----------------------------------------------------------------------------
def make_fused_kernel(num_heads, head_dim, n_prev, has_mask, fwd_shift, bwd_shift):
    H, D = num_heads, head_dim

    def kernel(*refs):
        it = iter(refs)
        x_ref = next(it)
        wq_ref = next(it)
        wk_ref = next(it)
        wv_ref = next(it)
        gamma_ref = next(it)                    # (1, 1, E)
        cos_ref = next(it)
        sina_ref = next(it)
        sinb_ref = next(it)
        gfin_ref = next(it)                     # (1, E)
        wout_ref = next(it)                     # (E, E) bf16
        lam_ref = next(it)                      # SMEM (L,)
        alpha_ref = next(it)                    # SMEM (1,)
        mask_ref = next(it) if has_mask else None
        o_ref = next(it)                        # (1, T, E) output block
        comb_ref = next(it)                     # VMEM (T, E) f32 scratch
        if n_prev > 0:
            kc_ref = next(it)                   # VMEM (n_prev, T, E) bf16
            vc_ref = next(it)

        i = pl.program_id(1)
        n_layers = pl.num_programs(1)

        @pl.when(i == 0)
        def _():
            comb_ref[...] = jnp.zeros_like(comb_ref)

        x = x_ref[0]                            # (T, E) f32
        xb = x.astype(jnp.bfloat16)

        # full-width projections, bf16 MXU with f32 accumulation
        q = jnp.dot(xb, wq_ref[0], preferred_element_type=jnp.float32)
        k = jnp.dot(xb, wk_ref[0], preferred_element_type=jnp.float32)
        v = jnp.dot(xb, wv_ref[0], preferred_element_type=jnp.float32)

        cos_e = cos_ref[...]
        sin_a = sina_ref[...]                   # nonzero on 2nd half of each head
        sin_b = sinb_ref[...]                   # -sin on 1st half of each head

        # full-width rotary: rotate-half within each head via two static XLU
        # lane rotations; the signed sin tables zero out cross-head wrap.
        def rope(t):
            fwd = pltpu.roll(t, fwd_shift, 1)   # t[:, j - half]
            bwd = pltpu.roll(t, bwd_shift, 1)   # t[:, j + half]
            return t * cos_e + fwd * sin_a + bwd * sin_b

        q = rope(q)                             # scaling pre-folded into wq
        k = rope(k)

        q_b = q.astype(jnp.bfloat16)
        k_b = k.astype(jnp.bfloat16)
        v_b = v.astype(jnp.bfloat16)

        if n_prev > 0:
            @pl.when(i < n_layers - 1)
            def _():
                kc_ref[i] = k_b                 # bf16 K/V cache kept in VMEM
                vc_ref[i] = v_b

        if has_mask:
            mask = mask_ref[...]

        head_outs = []
        # TODO(synk): for large H convert this static unroll into a
        # lax.fori_loop to bound vreg live ranges; H is tiny here.
        for h in range(H):
            sl = slice(h * D, (h + 1) * D)
            qh = q_b[:, sl]                     # (T, D) bf16
            kh = k_b[:, sl]
            vh = v_b[:, sl]

            s1 = lax.dot_general(qh, kh, (((1,), (1,)), ((), ())),
                                 preferred_element_type=jnp.float32)  # (T, T)
            if has_mask:
                # TODO(synk): a fully -inf mask row yields NaN (same as the
                # reference softmax); add a floor if such masks can occur.
                s1 = s1 + mask

            m = jnp.max(s1, axis=-1, keepdims=True)
            p1 = jnp.exp(s1 - m)
            l = jnp.sum(p1, axis=-1, keepdims=True)
            num = jnp.dot(p1.astype(jnp.bfloat16), vh,
                          preferred_element_type=jnp.float32)          # (T, D)

            if n_prev > 0:
                # Online softmax over the i previous layers' unique K/V blocks.
                # Block j appears 2^(i-1-j) times in the reference accumulated
                # cache -> scale its exp-sum / PV contribution instead of
                # duplicating the data (kills the quadratic K/V growth).
                def body(j, carry):
                    m0, l0, num0 = carry
                    kp = kc_ref[j][:, sl]
                    vp = vc_ref[j][:, sl]
                    s2 = lax.dot_general(qh, kp, (((1,), (1,)), ((), ())),
                                         preferred_element_type=jnp.float32)
                    mult = jnp.left_shift(1, i - 1 - j).astype(jnp.float32)
                    m1 = jnp.maximum(m0, jnp.max(s2, axis=-1, keepdims=True))
                    scale = jnp.exp(m0 - m1)
                    p2 = jnp.exp(s2 - m1)
                    l1 = scale * l0 + mult * jnp.sum(p2, axis=-1, keepdims=True)
                    num1 = scale * num0 + mult * jnp.dot(
                        p2.astype(jnp.bfloat16), vp,
                        preferred_element_type=jnp.float32)
                    return m1, l1, num1

                m, l, num = lax.fori_loop(0, i, body, (m, l, num))

            head_outs.append(num * pl.reciprocal(l, approx=True))

        # lane-dense (T, E) assembly + RMSNorm + lambda scaling
        attn = jnp.concatenate(head_outs, axis=-1)
        ms = jnp.mean(attn * attn, axis=-1, keepdims=True)
        attn = attn * lax.rsqrt(ms + EPS_RMS) * gamma_ref[0, 0]
        comb_ref[...] = comb_ref[...] + attn * lam_ref[i]

        @pl.when(i == n_layers - 1)
        def _():
            y = comb_ref[...] + alpha_ref[0] * x
            ms2 = jnp.mean(y * y, axis=-1, keepdims=True)
            y = y * lax.rsqrt(ms2 + EPS_RMS) * gfin_ref[0]
            o_ref[0] = jnp.dot(y.astype(jnp.bfloat16), wout_ref[...],
                               preferred_element_type=jnp.float32)

    return kernel


# ----------------------------------------------------------------------------
# Wrapper: one fused pallas_call for all introspective layers
# ----------------------------------------------------------------------------
def introspective_attention(x, rel_pos, params, attn_mask=None):
    cos, sin = rel_pos
    B, T, E = x.shape
    H = params["num_heads"]
    D = E // H
    half = D // 2
    scaling = D ** (-0.5)
    L = len(params["layers"])

    # lambda weights: layer_norm(sigmoid(raw)) over the layer axis (host glue)
    sig = jax.nn.sigmoid(params["lambda_raw"])
    mu = jnp.mean(sig)
    var = jnp.mean((sig - mu) ** 2)
    lam = (sig - mu) / jnp.sqrt(var + EPS_LN)

    # rotary tables packed lane-dense to (T, E): cos tiled per head; sin split
    # into the two signed rotate-half contributions.
    cos_e = jnp.tile(cos, (1, H))
    sin_t = jnp.tile(sin, (1, H))
    col = jnp.arange(E) % D
    sin_a = jnp.where(col >= half, sin_t, 0.0)     # pairs with x[j - half]
    sin_b = jnp.where(col < half, -sin_t, 0.0)     # pairs with x[j + half]

    roll_jnp = _roll_matches_jnp()
    fwd_shift = half if roll_jnp else (E - half)
    bwd_shift = (E - half) if roll_jnp else half

    has_mask = attn_mask is not None
    # With an additive mask, accumulated-KV columns get -inf per the reference
    # semantics -> exactly zero attention weight, so prev-KV work is skipped.
    n_prev = (L - 1) if (L > 1 and not has_mask) else 0

    f32, bf16 = jnp.float32, jnp.bfloat16
    # scaling folded into wq (rope is linear -> exact); weights cast to bf16
    wq_s = jnp.stack([lp["wqT"] * scaling for lp in params["layers"]]).astype(bf16)
    wk_s = jnp.stack([lp["wkT"] for lp in params["layers"]]).astype(bf16)
    wv_s = jnp.stack([lp["wvT"] for lp in params["layers"]]).astype(bf16)
    gamma_s = jnp.stack([lp["gamma"] for lp in params["layers"]]).reshape(L, 1, E)
    woutT = params["woutT"].astype(bf16)
    gfin = params["gamma_final"].reshape(1, E)

    in_arrays = [x, wq_s, wk_s, wv_s, gamma_s, cos_e, sin_a, sin_b,
                 gfin, woutT, lam.astype(f32), params["alpha"].astype(f32)]
    # TODO(synk): at realistic E, tile the (E,E) weight blocks over the
    # contraction/output dims (inner pipeline) and use pipeline_mode=
    # pl.Buffered(1) on the constant-index rope/wout specs.
    in_specs = [
        pl.BlockSpec((1, T, E), lambda b, l: (b, 0, 0)),
        pl.BlockSpec((1, E, E), lambda b, l: (l, 0, 0)),
        pl.BlockSpec((1, E, E), lambda b, l: (l, 0, 0)),
        pl.BlockSpec((1, E, E), lambda b, l: (l, 0, 0)),
        pl.BlockSpec((1, 1, E), lambda b, l: (l, 0, 0)),
        pl.BlockSpec((T, E), lambda b, l: (0, 0)),
        pl.BlockSpec((T, E), lambda b, l: (0, 0)),
        pl.BlockSpec((T, E), lambda b, l: (0, 0)),
        pl.BlockSpec((1, E), lambda b, l: (0, 0)),
        pl.BlockSpec((E, E), lambda b, l: (0, 0)),
        pl.BlockSpec(memory_space=pltpu.MemorySpace.SMEM),
        pl.BlockSpec(memory_space=pltpu.MemorySpace.SMEM),
    ]
    if has_mask:
        in_arrays.append(attn_mask.astype(f32))
        in_specs.append(pl.BlockSpec((T, T), lambda b, l: (0, 0)))

    scratch = [pltpu.VMEM((T, E), f32)]
    if n_prev > 0:
        scratch += [pltpu.VMEM((n_prev, T, E), bf16),
                    pltpu.VMEM((n_prev, T, E), bf16)]

    # VMEM budget from actual block sizes (double-buffering headroom), capped
    # below the smallest physical VMEM (v7x: 64 MiB per TC).
    block_bytes = (4 * (2 * T * E)               # x block + out block
                   + 2 * 3 * E * E               # bf16 weight blocks
                   + 4 * (3 * T * E + 2 * E)     # rope tables + gammas
                   + 2 * E * E                   # wout (bf16)
                   + (4 * T * T if has_mask else 0)
                   + 4 * T * E                   # combined scratch
                   + 2 * 2 * n_prev * T * E)     # bf16 K/V caches
    vmem_limit = int(min(48 * 1024 * 1024, 4 * block_bytes + 8 * 1024 * 1024))

    kernel = make_fused_kernel(H, D, n_prev, has_mask, fwd_shift, bwd_shift)
    out = pl.pallas_call(
        kernel,
        grid=(B, L),
        in_specs=in_specs,
        out_specs=pl.BlockSpec((1, T, E), lambda b, l: (b, 0, 0)),
        out_shape=jax.ShapeDtypeStruct((B, T, E), f32),
        scratch_shapes=scratch,
        compiler_params=pltpu.CompilerParams(
            dimension_semantics=("parallel", "arbitrary"),
            vmem_limit_bytes=vmem_limit),
    )(*in_arrays)
    return out


# ----------------------------------------------------------------------------
# Pure-JAX f32 reference (intended module semantics) for correctness checking
# ----------------------------------------------------------------------------
def reference(x, rel_pos, params, attn_mask=None):
    cos, sin = rel_pos
    B, T, E = x.shape
    H = params["num_heads"]
    D = E // H
    scaling = D ** (-0.5)

    sig = jax.nn.sigmoid(params["lambda_raw"])
    mu = jnp.mean(sig)
    var = jnp.mean((sig - mu) ** 2)
    lam = (sig - mu) / jnp.sqrt(var + EPS_LN)

    k_acc = v_acc = None
    combined = jnp.zeros_like(x)
    for i, lp in enumerate(params["layers"]):
        q = (x @ lp["wqT"]).reshape(B, T, H, D)
        k = (x @ lp["wkT"]).reshape(B, T, H, D)
        v = (x @ lp["wvT"]).reshape(B, T, H, D)
        c = cos[None, :, None, :]
        s = sin[None, :, None, :]
        q = q * c + _rotate_half(q) * s
        k = k * c + _rotate_half(k) * s
        q = q.transpose(0, 2, 1, 3) * scaling
        k = k.transpose(0, 2, 1, 3)
        v = v.transpose(0, 2, 1, 3)
        if i > 0:
            k = jnp.concatenate([k, k_acc], axis=2)
            v = jnp.concatenate([v, v_acc], axis=2)
        S = k.shape[2]
        scores = jnp.einsum("bhtd,bhsd->bhts", q, k)
        if attn_mask is not None:
            m = attn_mask.astype(jnp.float32)
            if i > 0:
                m = jnp.concatenate(
                    [m, jnp.full((T, S - T), -jnp.inf, jnp.float32)], axis=-1)
            scores = scores + m
        w = jax.nn.softmax(scores, axis=-1)
        attn = jnp.einsum("bhts,bhsd->bhtd", w, v)
        attn = attn.transpose(0, 2, 1, 3).reshape(B, T, E)
        ms = jnp.mean(attn * attn, axis=-1, keepdims=True)
        attn = attn * jax.lax.rsqrt(ms + EPS_RMS) * lp["gamma"]
        combined = combined + attn * lam[i]
        if k_acc is None:
            k_acc, v_acc = k, v
        else:
            k_acc = jnp.concatenate([k_acc, k], axis=2)
            v_acc = jnp.concatenate([v_acc, v], axis=2)
    y = combined + params["alpha"][0] * x
    ms = jnp.mean(y * y, axis=-1, keepdims=True)
    y = y * jax.lax.rsqrt(ms + EPS_RMS) * params["gamma_final"]
    return y @ params["woutT"]


# ----------------------------------------------------------------------------
# Deterministic parameter init (matching __init__ shapes)
# ----------------------------------------------------------------------------
def init_params(key, E, H, n_layers=3):
    bound = 1.0 / math.sqrt(E)  # kaiming_uniform_(a=sqrt(5)), fan_in = E
    layers = []
    for _ in range(n_layers):
        key, k1, k2, k3 = jax.random.split(key, 4)
        wq = jax.random.uniform(k1, (E, E), jnp.float32, -bound, bound)  # (out, in)
        wk = jax.random.uniform(k2, (E, E), jnp.float32, -bound, bound)
        wv = jax.random.uniform(k3, (E, E), jnp.float32, -bound, bound)
        layers.append(dict(wqT=wq.T, wkT=wk.T, wvT=wv.T,
                           gamma=jnp.ones((E,), jnp.float32)))
    key, ko, kl = jax.random.split(key, 3)
    wout = jax.random.uniform(ko, (E, E), jnp.float32, -bound, bound)
    # torch zero-inits the lambdas (zeroing all layer outputs); use nonzero
    # deterministic values so the attention path is exercised.
    lambda_raw = jax.random.uniform(kl, (n_layers,), jnp.float32, -1.0, 1.0)
    return dict(num_heads=H, layers=layers, woutT=wout.T,
                gamma_final=jnp.ones((E,), jnp.float32),
                alpha=jnp.ones((1,), jnp.float32),
                lambda_raw=lambda_raw)


def make_rotary(T, D):
    inv_freq = 1.0 / (10000.0 ** (jnp.arange(0, D, 2, dtype=jnp.float32) / D))
    ang = jnp.arange(T, dtype=jnp.float32)[:, None] * inv_freq[None, :]
    cos = jnp.concatenate([jnp.cos(ang), jnp.cos(ang)], axis=-1)
    sin = jnp.concatenate([jnp.sin(ang), jnp.sin(ang)], axis=-1)
    return cos, sin


if __name__ == "__main__":
    B, T, E, H = 2, 8, 128, 4  # head_dim = 32, model_parallel_size = 1
    key = jax.random.PRNGKey(0)
    key, kx = jax.random.split(key)
    x = jax.random.normal(kx, (B, T, E), jnp.float32)
    params = init_params(key, E, H, n_layers=3)
    rel_pos = make_rotary(T, E // H)

    out = introspective_attention(x, rel_pos, params, attn_mask=None)
    out = jax.block_until_ready(out)

    ref = reference(x, rel_pos, params, attn_mask=None)
    assert out.shape == (B, T, E)
    # bf16 MXU matmuls + approx reciprocal => loosened tolerance vs f32 reference
    assert bool(jnp.allclose(out, ref, rtol=5e-2, atol=5e-2)), \
        float(jnp.max(jnp.abs(out - ref)))
    print("KERNEL_OK")
</pallas_src>

<mosaic_0001>
module attributes {stable_mosaic.version = 11 : i64} {
  func.func @k(%arg0: memref<8x128xf32, #tpu.memory_space<vmem>>, %arg1: memref<8x128xf32, #tpu.memory_space<vmem>>) attributes {dimension_semantics = [], scalar_prefetch = 0 : i64, scratch_operands = 0 : i64, tpu.core_type = #tpu.core_type<tc>} {
    %c0 = arith.constant 0 : index
    %c0_0 = arith.constant 0 : index
    %0 = vector.load %arg0[%c0, %c0_0] : memref<8x128xf32, #tpu.memory_space<vmem>>, vector<8x128xf32>
    %c1_i32 = arith.constant 1 : i32
    %1 = tpu.dynamic_rotate %0 by %c1_i32 dim 1 : vector<8x128xf32>, i32 -> vector<8x128xf32>
    %c0_1 = arith.constant 0 : index
    %c0_2 = arith.constant 0 : index
    %2 = vector.load %arg1[%c0_1, %c0_2] : memref<8x128xf32, #tpu.memory_space<vmem>>, vector<8x128xf32>
    tpu.vector_store %arg1[%c0_1, %c0_2], %1 {strides = array<i32>} : memref<8x128xf32, #tpu.memory_space<vmem>>, vector<8x128xf32>,
    return
  }
}

</mosaic_0001>

<llo_original>
// kernel: tpu_custom_call.1
$region0: #{tpu_custom_call.1}
  #allocation0 [shape = 'u32[]', space=smem, size = 0x4, offset = 0x4, fixed_abs, tag = 'smem constant byte address 0x4 - core index']
  #allocation1 [shape = 'u32[144,128]{1,0:T(1,128)}', space=vmem, size = 0x12000, scoped, tag = 'internal scratch']
  %s0 = inlined_call_operand.hbm [shape: f32[8,128], index: 0, kind: input, shape index: {}]
  %s1 = inlined_call_operand.hbm [shape: f32[8,128], index: 1, kind: output, shape index: {}]
  %s2 = sld [smem:[#allocation0]]
  $region18: #{tpu_custom_call.1} parent=0
    _
  %s4 = ssub.s32 1, %s2
  %s5 = scalar_select 0, %s4, %s2
  $region1: #{tpu_custom_call.1} parent=0
    #allocation2 [shape = 'u8[4096]{0}', space=vmem, size = 0x1000, scoped, tag = 'input window, operand 0, single buffered']
    #allocation3 [shape = 's32[1]{0}', space=sflag, size = 0x4, scoped, tag = 'scoped memory for tpu_custom_call.1']
    #allocation4 [shape = 's32[1]{0}', space=sflag, size = 0x4, scoped, tag = 'scoped memory for tpu_custom_call.1']
    #allocation5 [shape = 'u8[4096]{0}', space=vmem, size = 0x1000, scoped, tag = 'output window, operand 0, single buffered']
    %6 = vsyncpa [#allocation3], 0
    %7 = vsyncpa [#allocation4], 0
    // Predicated region
    $region2: #{tpu_custom_call.1} parent=1 // pred_check
      _
    $region3: #{tpu_custom_call.1} parent=1 // pred_check_branch
      %9 = sbr.rel (0) target = $region5
    $region4: #{tpu_custom_call.1} parent=1 // pred_region
      %s11 = ssub.s32 128, 128
      %12 = vsyncadd [#allocation3], %s11
      %s14 = sshll.u32 [#allocation2], 4
      %s15 = int_to_ptr.vmem [resolvable:$true] %s14
      %17 = dma.hbm_to_vmem [thread:$0]  %s0, 128, %s15, [#allocation3]
    $region5: #{tpu_custom_call.1} parent=1 // pred_fallthru
      _
    // Predicated region
    $region6: #{tpu_custom_call.1} parent=1 // pred_check
      _
    $region7: #{tpu_custom_call.1} parent=1 // pred_check_branch
      %19 = sbr.rel (0) target = $region9
    $region8: #{tpu_custom_call.1} parent=1 // pred_region
      %20 = dma.done [#allocation3], 128
    $region9: #{tpu_custom_call.1} parent=1 // pred_fallthru
      _
    %v21 = vld [vmem:[#allocation2] sm:$0xff]
    %22 = vrot.lane.b32.xlu0 %v21, 1
    %v23 = vpop.permute.xlu0 %22
    %24 = vst [vmem:[#allocation5] sm:$0xff] %v23
    // Predicated region
    $region10: #{tpu_custom_call.1} parent=1 // pred_check
      _
    $region11: #{tpu_custom_call.1} parent=1 // pred_check_branch
      %26 = sbr.rel (0) target = $region13
    $region12: #{tpu_custom_call.1} parent=1 // pred_region
      %s28 = ssub.s32 128, 128
      %29 = vsyncadd [#allocation4], %s28
      %s31 = sshll.u32 [#allocation5], 4
      %s32 = int_to_ptr.vmem [resolvable:$true] %s31
      %34 = dma.vmem_to_hbm [thread:$0]  %s32, 128, %s1, [#allocation4]
    $region13: #{tpu_custom_call.1} parent=1 // pred_fallthru
      _
    // Predicated region
    $region14: #{tpu_custom_call.1} parent=1 // pred_check
      _
    $region15: #{tpu_custom_call.1} parent=1 // pred_check_branch
      %36 = sbr.rel (0) target = $region17
    $region16: #{tpu_custom_call.1} parent=1 // pred_region
      %37 = dma.done [#allocation4], 128
    $region17: #{tpu_custom_call.1} parent=1 // pred_fallthru
      _
    %38 = vsyncpa [#allocation3], 1
    %39 = vsyncpa [#allocation4], 1

</llo_original>
